<compile_context>
chip_gen: v5e
topology: v5e:2x2
jax: 0.10.0
libtpu: 0.0.40
codegen_flags: <defaults>
</compile_context>

<pallas_src>
import functools

import jax
import jax.numpy as jnp
from jax import lax
from jax.experimental import pallas as pl
from jax.experimental.pallas import tpu as pltpu


def _round_up(a, b):
    return (a + b - 1) // b * b


# ----------------------------------------------------------------------------
# Kernels
# ----------------------------------------------------------------------------
def _gcn_summean_kernel(adj_ref, x_ref, self_ref, w1t_ref, inv_ref,
                        out_ref, acc_ref, *, x_resident, apply_inv):
    """sum / mean aggregation. acc_ref accumulates agg = adj @ x over K tiles."""
    k = pl.program_id(1)

    @pl.when(k == 0)
    def _():
        acc_ref[...] = jnp.zeros_like(acc_ref)

    tk = adj_ref.shape[1]
    if x_resident:
        xk = x_ref[pl.ds(pl.multiple_of(k * tk, tk), tk), :]   # bf16 [tk, F_in]
    else:
        xk = x_ref[...]                                        # bf16 [tk, F_in]

    # bf16 x bf16 MXU matmul (native rate), f32 accumulate. Adjacency is 0/1,
    # so the bf16 adjacency stream is exact.
    acc_ref[...] += jnp.dot(adj_ref[...], xk, preferred_element_type=jnp.float32)

    @pl.when(k == pl.num_programs(1) - 1)
    def _():
        agg = acc_ref[...]
        if apply_inv:                      # 'mean': scale by 1/deg once, at finalize
            agg = agg * inv_ref[...]
        h = jnp.dot(agg.astype(jnp.bfloat16), w1t_ref[...],
                    preferred_element_type=jnp.float32)
        out_ref[...] = (h + self_ref[...]).astype(out_ref.dtype)


def _gcn_max_kernel(adjt_ref, x_ref, self_ref, w1t_ref,
                    out_ref, acc_ref, *, chunk, x_resident):
    """max aggregation: tiled running max over src chunks.

    adjt_ref is the transposed adjacency tile [TK(src), TM(dst)] so both the
    adjacency chunk and the x chunk slice along the sublane axis.
    """
    k = pl.program_id(1)
    neg_bf16 = jnp.asarray(-1e30, dtype=jnp.bfloat16)   # finite sentinel (no inf/NaN)

    @pl.when(k == 0)
    def _():
        acc_ref[...] = jnp.full_like(acc_ref, -1e30)

    tk = adjt_ref.shape[0]
    base = k * tk if x_resident else 0

    def body(c, acc):
        s0 = pl.multiple_of(c * chunk, chunk)
        a = adjt_ref[pl.ds(s0, chunk), :]                              # bf16 [chunk, TM]
        xr = x_ref[pl.ds(pl.multiple_of(base + c * chunk, chunk), chunk), :]  # bf16 [chunk, F_in]
        # cand[j, i, f] = x[j, f] if edge j->i else -1e30  (bf16 VPU select/max)
        cand = jnp.where(a[:, :, None] > 0, xr[:, None, :], neg_bf16)
        m = jnp.max(cand, axis=0).astype(jnp.float32)                  # [TM, F_in]
        return jnp.maximum(acc, m)

    acc_ref[...] = lax.fori_loop(0, tk // chunk, body, acc_ref[...], unroll=2)

    @pl.when(k == pl.num_programs(1) - 1)
    def _():
        h = jnp.dot(acc_ref[...].astype(jnp.bfloat16), w1t_ref[...],
                    preferred_element_type=jnp.float32)
        out_ref[...] = (h + self_ref[...]).astype(out_ref.dtype)


# ----------------------------------------------------------------------------
# Wrapper
# ----------------------------------------------------------------------------
def graph_conv_layer(adj, x, w1, b1, w2, b2, bias, *, aggregation="sum"):
    """Pallas implementation of GraphConvLayer.forward.

    adj: [N, N] dense adjacency, adj[i, j] = 1 iff edge j -> i (binary).
    x:   [N, F_in]
    w1, w2: [F_out, F_in] (torch nn.Linear layout); b1, b2, bias: [F_out]
    """
    if aggregation not in ("sum", "mean", "max"):
        raise ValueError("'aggregation' argument has to be one of 'sum', 'mean' or 'max'.")

    n, f_in = x.shape
    f_out = w1.shape[0]

    # Lane-align feature dims.
    f_in_p = _round_up(f_in, 128)
    f_out_p = _round_up(f_out, 128)
    n_128 = _round_up(n, 128)

    if aggregation == "max":
        tm_pref, tk_pref, chunk = 128, 256, 16     # chunk=16 matches bf16 sublane packing
    else:
        # Large K tile: adjacency streaming is the dominant HBM stream; the
        # working set stays far below the explicit 32 MiB VMEM limit below.
        tm_pref, tk_pref, chunk = 256, 1024, 0

    tm = min(tm_pref, n_128)
    tk = min(tk_pref, n_128)

    # Pad dst rows and src cols independently (no lcm blow-up for mid-sized N).
    n_rows_p = _round_up(n, tm)     # dst axis
    n_cols_p = _round_up(n, tk)     # src / reduction axis

    # Keep neighbour-side x fully VMEM-resident when small (single DMA total).
    x_resident = (n_cols_p * f_in_p * 2) <= (8 << 20)

    # ---- wrapper-side operand prep (bf16 before padding; no f32 N^2 pass) ----
    x_bf = x.astype(jnp.bfloat16)
    adj_bf = adj.astype(jnp.bfloat16)            # binary adjacency: exact in bf16

    x_p = jnp.zeros((n_cols_p, f_in_p), jnp.bfloat16).at[:n, :f_in].set(x_bf)

    if aggregation == "max":
        adj_in = jnp.zeros((n_cols_p, n_rows_p), jnp.bfloat16).at[:n, :n].set(adj_bf.T)
    else:
        adj_in = jnp.zeros((n_rows_p, n_cols_p), jnp.bfloat16).at[:n, :n].set(adj_bf)

    w1t = jnp.zeros((f_in_p, f_out_p), jnp.bfloat16).at[:f_in, :f_out].set(
        w1.T.astype(jnp.bfloat16))

    # Self-loop projection + all biases, precomputed in XLA at full f32.
    fold_bias = (b1 + b2 + bias).astype(jnp.float32)
    self_full = x.astype(jnp.float32) @ w2.T.astype(jnp.float32) + fold_bias[None, :]
    self_p = jnp.zeros((n_rows_p, f_out_p), jnp.float32).at[:n, :f_out].set(self_full)

    grid = (n_rows_p // tm, n_cols_p // tk)

    if x_resident:
        x_spec = pl.BlockSpec((n_cols_p, f_in_p), lambda i, k: (0, 0))   # resident
    else:
        x_spec = pl.BlockSpec((tk, f_in_p), lambda i, k: (k, 0))         # streamed per K

    self_spec = pl.BlockSpec((tm, f_out_p), lambda i, k: (i, 0))         # resident over K
    w1_spec = pl.BlockSpec((f_in_p, f_out_p), lambda i, k: (0, 0))       # resident
    out_spec = pl.BlockSpec((tm, f_out_p), lambda i, k: (i, 0))

    if aggregation == "max":
        kernel = functools.partial(_gcn_max_kernel, chunk=chunk, x_resident=x_resident)
        in_specs = [
            pl.BlockSpec((tk, tm), lambda i, k: (k, i)),   # adj^T tile [src, dst]
            x_spec, self_spec, w1_spec,
        ]
        args = (adj_in, x_p, self_p, w1t)
    else:
        if aggregation == "mean":
            deg = jnp.sum(adj.astype(jnp.float32), axis=-1, keepdims=True)
            inv = 1.0 / jnp.maximum(deg, 1.0)
        else:  # sum (inv unused in-kernel, apply_inv=False)
            inv = jnp.ones((n, 1), jnp.float32)
        inv_p = jnp.ones((n_rows_p, 1), jnp.float32).at[:n].set(inv)

        kernel = functools.partial(_gcn_summean_kernel, x_resident=x_resident,
                                   apply_inv=(aggregation == "mean"))
        in_specs = [
            pl.BlockSpec((tm, tk), lambda i, k: (i, k)),   # adj tile [dst, src]
            x_spec, self_spec, w1_spec,
            pl.BlockSpec((tm, 1), lambda i, k: (i, 0)),    # 1/deg per dst row tile
        ]
        args = (adj_in, x_p, self_p, w1t, inv_p)

    out_p = pl.pallas_call(
        kernel,
        out_shape=jax.ShapeDtypeStruct((n_rows_p, f_out_p), x.dtype),
        grid_spec=pltpu.PrefetchScalarGridSpec(
            num_scalar_prefetch=0,
            grid=grid,
            in_specs=in_specs,
            out_specs=out_spec,
            scratch_shapes=[pltpu.VMEM((tm, f_in_p), jnp.float32)],   # agg accumulator
        ),
        compiler_params=pltpu.CompilerParams(
            dimension_semantics=("parallel", "arbitrary"),
            vmem_limit_bytes=32 * 1024 * 1024),
    )(*args)

    return out_p[:n, :f_out]


# ----------------------------------------------------------------------------
# Reference + test
# ----------------------------------------------------------------------------
def _reference(adj, x, w1, b1, w2, b2, bias, *, aggregation="sum"):
    if aggregation == "sum":
        agg = adj @ x
    elif aggregation == "mean":
        agg = (adj @ x) / jnp.maximum(jnp.sum(adj, axis=-1, keepdims=True), 1.0)
    else:
        neg = jnp.finfo(jnp.float32).min
        agg = jnp.max(jnp.where(adj[:, :, None] > 0, x[None, :, :], neg), axis=1)
    return agg @ w1.T + b1 + x @ w2.T + b2 + bias


if __name__ == "__main__":
    key = jax.random.PRNGKey(0)
    k_x, k_w1, k_b1, k_w2, k_b2 = jax.random.split(key, 5)

    N = 8            # number of nodes
    F_IN = 16        # in_features
    F_OUT = 32       # out_features

    # Node features.
    x = jax.random.normal(k_x, (N, F_IN), dtype=jnp.float32)

    # Deterministic small graph: ring (i-1 -> i) plus an extra edge per node.
    adj = jnp.zeros((N, N), dtype=jnp.float32)
    for i in range(N):
        adj = adj.at[i, (i - 1) % N].set(1.0)          # edge (i-1) -> i
        adj = adj.at[i, (i + 3) % N].set(1.0)          # edge (i+3) -> i

    # Parameters (torch nn.Linear layout: weight [out, in], bias [out]).
    lim = 1.0 / jnp.sqrt(jnp.float32(F_IN))
    w1 = jax.random.uniform(k_w1, (F_OUT, F_IN), minval=-lim, maxval=lim, dtype=jnp.float32)
    b1 = jax.random.uniform(k_b1, (F_OUT,), minval=-lim, maxval=lim, dtype=jnp.float32)
    w2 = jax.random.uniform(k_w2, (F_OUT, F_IN), minval=-lim, maxval=lim, dtype=jnp.float32)
    b2 = jax.random.uniform(k_b2, (F_OUT,), minval=-lim, maxval=lim, dtype=jnp.float32)
    bias = jnp.zeros((F_OUT,), dtype=jnp.float32)       # self.bias param (zeros)

    ok = True
    for agg_mode in ("sum", "mean", "max"):
        out = graph_conv_layer(adj, x, w1, b1, w2, b2, bias, aggregation=agg_mode)
        out = jax.block_until_ready(out)
        ref = _reference(adj, x, w1, b1, w2, b2, bias, aggregation=agg_mode)
        # bf16 MXU path on the aggregation/W1 matmuls -> loosened tolerance.
        if not jnp.allclose(out, ref, atol=5e-2, rtol=5e-2):
            ok = False
            print(f"mismatch for aggregation={agg_mode}: "
                  f"max abs err = {float(jnp.max(jnp.abs(out - ref)))}")

    if ok:
        print("KERNEL_OK")
</pallas_src>

<mosaic_0001>
module attributes {stable_mosaic.version = 11 : i64} {
  func.func @_gcn_summean_kernel(%arg0: i32, %arg1: i32, %arg2: memref<128x128xbf16, #tpu.memory_space<vmem>>, %arg3: memref<128x128xbf16, #tpu.memory_space<vmem>>, %arg4: memref<128x128xf32, #tpu.memory_space<vmem>>, %arg5: memref<128x128xbf16, #tpu.memory_space<vmem>>, %arg6: memref<128x1xf32, #tpu.memory_space<vmem>>, %arg7: memref<128x128xf32, #tpu.memory_space<vmem>>, %arg8: memref<128x128xf32, #tpu.memory_space<vmem>>) attributes {dimension_semantics = [#tpu.dimension_semantics<parallel>, #tpu.dimension_semantics<arbitrary>], iteration_bounds = array<i64: 1, 1>, scalar_prefetch = 0 : i64, scratch_operands = 1 : i64, tpu.core_type = #tpu.core_type<tc>, window_params = [{transform_indices = @transform_0, window_bounds = array<i64: 128, 128>}, {pipeline_mode = #tpu.pipeline_mode<synchronous>, transform_indices = @transform_1, window_bounds = array<i64: 128, 128>}, {transform_indices = @transform_2, window_bounds = array<i64: 128, 128>}, {pipeline_mode = #tpu.pipeline_mode<synchronous>, transform_indices = @transform_3, window_bounds = array<i64: 128, 128>}, {transform_indices = @transform_4, window_bounds = array<i64: 128, 1>}, {transform_indices = @transform_5, window_bounds = array<i64: 128, 128>}]} {
    %c0_i32 = arith.constant 0 : i32
    %0 = arith.cmpi eq, %arg1, %c0_i32 : i32
    %1 = arith.extui %0 : i1 to i32
    %c0_i32_0 = arith.constant 0 : i32
    %2 = arith.cmpi ne, %1, %c0_i32_0 : i32
    scf.if %2 {
      %cst_9 = arith.constant 0.000000e+00 : f32
      %15 = vector.broadcast %cst_9 : f32 to vector<128x128xf32>
      %c0_10 = arith.constant 0 : index
      %c0_11 = arith.constant 0 : index
      %16 = vector.load %arg8[%c0_10, %c0_11] : memref<128x128xf32, #tpu.memory_space<vmem>>, vector<128x128xf32>
      tpu.vector_store %arg8[%c0_10, %c0_11], %15 {strides = array<i32>} : memref<128x128xf32, #tpu.memory_space<vmem>>, vector<128x128xf32>,
    } else {
    }
    %c128_i32 = arith.constant 128 : i32
    %3 = arith.muli %arg1, %c128_i32 : i32
    %4 = tpu.assume_multiple %3, 128 : i32
    %5 = arith.index_cast %4 : i32 to index
    %c0 = arith.constant 0 : index
    %6 = vector.load %arg3[%5, %c0] : memref<128x128xbf16, #tpu.memory_space<vmem>>, vector<128x128xbf16>
    %c0_1 = arith.constant 0 : index
    %c0_2 = arith.constant 0 : index
    %7 = vector.load %arg8[%c0_1, %c0_2] : memref<128x128xf32, #tpu.memory_space<vmem>>, vector<128x128xf32>
    %c0_3 = arith.constant 0 : index
    %c0_4 = arith.constant 0 : index
    %8 = vector.load %arg2[%c0_3, %c0_4] : memref<128x128xbf16, #tpu.memory_space<vmem>>, vector<128x128xbf16>
    %cst = arith.constant dense<0.000000e+00> : vector<128x128xf32>
    %9 = tpu.matmul %8, %6, %cst {dimension_numbers = #tpu.dot_dimension_numbers<[1], [0], [0], [1], [0, 0, 1, 1], [], []>} : vector<128x128xbf16>, vector<128x128xbf16>, vector<128x128xf32> -> vector<128x128xf32>
    %10 = arith.addf %7, %9 : vector<128x128xf32>
    %c0_5 = arith.constant 0 : index
    %c0_6 = arith.constant 0 : index
    %11 = vector.load %arg8[%c0_5, %c0_6] : memref<128x128xf32, #tpu.memory_space<vmem>>, vector<128x128xf32>
    tpu.vector_store %arg8[%c0_5, %c0_6], %10 {strides = array<i32>} : memref<128x128xf32, #tpu.memory_space<vmem>>, vector<128x128xf32>,
    %c0_i32_7 = arith.constant 0 : i32
    %12 = arith.cmpi eq, %arg1, %c0_i32_7 : i32
    %13 = arith.extui %12 : i1 to i32
    %c0_i32_8 = arith.constant 0 : i32
    %14 = arith.cmpi ne, %13, %c0_i32_8 : i32
    scf.if %14 {
      %c0_9 = arith.constant 0 : index
      %c0_10 = arith.constant 0 : index
      %15 = vector.load %arg8[%c0_9, %c0_10] : memref<128x128xf32, #tpu.memory_space<vmem>>, vector<128x128xf32>
      %16 = arith.truncf %15 : vector<128x128xf32> to vector<128x128xbf16>
      %c0_11 = arith.constant 0 : index
      %c0_12 = arith.constant 0 : index
      %17 = vector.load %arg5[%c0_11, %c0_12] : memref<128x128xbf16, #tpu.memory_space<vmem>>, vector<128x128xbf16>
      %cst_13 = arith.constant dense<0.000000e+00> : vector<128x128xf32>
      %18 = tpu.matmul %16, %17, %cst_13 {dimension_numbers = #tpu.dot_dimension_numbers<[1], [0], [0], [1], [0, 0, 1, 1], [], []>} : vector<128x128xbf16>, vector<128x128xbf16>, vector<128x128xf32> -> vector<128x128xf32>
      %c0_14 = arith.constant 0 : index
      %c0_15 = arith.constant 0 : index
      %19 = vector.load %arg4[%c0_14, %c0_15] : memref<128x128xf32, #tpu.memory_space<vmem>>, vector<128x128xf32>
      %20 = arith.addf %18, %19 : vector<128x128xf32>
      %c0_16 = arith.constant 0 : index
      %c0_17 = arith.constant 0 : index
      %21 = vector.load %arg7[%c0_16, %c0_17] : memref<128x128xf32, #tpu.memory_space<vmem>>, vector<128x128xf32>
      tpu.vector_store %arg7[%c0_16, %c0_17], %20 {strides = array<i32>} : memref<128x128xf32, #tpu.memory_space<vmem>>, vector<128x128xf32>,
    } else {
    }
    return
  }
  func.func @transform_0(%arg0: i32, %arg1: i32) -> (i32, i32) {
    %c0_i32 = arith.constant 0 : i32
    return %arg0, %arg1 : i32, i32
  }
  func.func @transform_1(%arg0: i32, %arg1: i32) -> (i32, i32) {
    %c0_i32 = arith.constant 0 : i32
    %c0_i32_0 = arith.constant 0 : i32
    %c0_i32_1 = arith.constant 0 : i32
    return %c0_i32, %c0_i32_0 : i32, i32
  }
  func.func @transform_2(%arg0: i32, %arg1: i32) -> (i32, i32) {
    %c0_i32 = arith.constant 0 : i32
    %c0_i32_0 = arith.constant 0 : i32
    return %arg0, %c0_i32 : i32, i32
  }
  func.func @transform_3(%arg0: i32, %arg1: i32) -> (i32, i32) {
    %c0_i32 = arith.constant 0 : i32
    %c0_i32_0 = arith.constant 0 : i32
    %c0_i32_1 = arith.constant 0 : i32
    return %c0_i32, %c0_i32_0 : i32, i32
  }
  func.func @transform_4(%arg0: i32, %arg1: i32) -> (i32, i32) {
    %c0_i32 = arith.constant 0 : i32
    %c0_i32_0 = arith.constant 0 : i32
    return %arg0, %c0_i32 : i32, i32
  }
  func.func @transform_5(%arg0: i32, %arg1: i32) -> (i32, i32) {
    %c0_i32 = arith.constant 0 : i32
    %c0_i32_0 = arith.constant 0 : i32
    return %arg0, %c0_i32 : i32, i32
  }
}

</mosaic_0001>

<llo_original>
// kernel: tpu_custom_call.1
$region0: #{tpu_custom_call.1}
  #allocation0 [shape = 'u32[]', space=smem, size = 0x4, offset = 0x4, fixed_abs, tag = 'smem constant byte address 0x4 - core index']
  #allocation1 [shape = 'u32[72,128]{1,0:T(1,128)}', space=vmem, size = 0x9000, scoped, tag = 'internal scratch']
  #allocation2 [shape = 'f32[128,128]{1,0:T(8,128)}', space=vmem, size = 0x10000, scoped, tag = 'scratch operand']
  %s0 = inlined_call_operand.hbm [shape: bf16[128,128], index: 0, kind: input, shape index: {}]
  %s1 = inlined_call_operand.hbm [shape: bf16[128,128], index: 1, kind: input, shape index: {}]
  %s2 = inlined_call_operand.vmem [shape: f32[128,128], index: 2, kind: input, shape index: {}]
  %s3 = inlined_call_operand.hbm [shape: bf16[128,128], index: 3, kind: input, shape index: {}]
  %s4 = inlined_call_operand.vmem [shape: f32[128,1], index: 4, kind: input, shape index: {}]
  %s5 = inlined_call_operand.hbm [shape: f32[128,128], index: 5, kind: output, shape index: {}]
  %s6 = sld [smem:[#allocation0]]
  $region50: #{tpu_custom_call.1} parent=0
    _
  %s8 = ssub.s32 1, %s6
  %s9 = scalar_select 0, %s8, %s6
  $region1: #{tpu_custom_call.1} parent=0
    #allocation3 [shape = 'u8[32768]{0}', space=vmem, size = 0x8000, scoped, tag = 'input window, operand 0, single buffered']
    #allocation4 [shape = 's32[1]{0}', space=sflag, size = 0x4, scoped, tag = 'scoped memory for tpu_custom_call.1']
    #allocation5 [shape = 's32[1]{0}', space=sflag, size = 0x4, scoped, tag = 'scoped memory for tpu_custom_call.1']
    #allocation6 [shape = 'u8[32768]{0}', space=vmem, size = 0x8000, scoped, tag = 'input window, operand 1, single buffered']
    #allocation7 [shape = 's32[1]{0}', space=sflag, size = 0x4, scoped, tag = 'scoped memory for tpu_custom_call.1']
    #allocation8 [shape = 'u8[32768]{0}', space=vmem, size = 0x8000, scoped, tag = 'input window, operand 3, single buffered']
    #allocation9 [shape = 'u8[65536]{0}', space=vmem, size = 0x10000, scoped, tag = 'output window, operand 0, single buffered']
    %10 = vsyncpa [#allocation4], 0
    %11 = vsyncpa [#allocation7], 0
    %12 = vsyncpa [#allocation5], 0
    // Predicated region
    $region2: #{tpu_custom_call.1} parent=1 // pred_check
      _
    $region3: #{tpu_custom_call.1} parent=1 // pred_check_branch
      %14 = sbr.rel (0) target = $region5
    $region4: #{tpu_custom_call.1} parent=1 // pred_region
      %16 = vsyncadd [#allocation4], 0
      %s17 = sshll.u32 %s0, 4
      %s18 = int_to_ptr.hbm [resolvable:$true] %s17
      %s19 = sshll.u32 [#allocation3], 4
      %s20 = int_to_ptr.vmem [resolvable:$true] %s19
      %25 = dma.hbm_to_vmem [thread:$0]  %s18, 1024, %s20, [#allocation4], 64, 64, 4
    $region5: #{tpu_custom_call.1} parent=1 // pred_fallthru
      _
    // Predicated region
    $region6: #{tpu_custom_call.1} parent=1 // pred_check
      _
    $region7: #{tpu_custom_call.1} parent=1 // pred_check_branch
      %27 = sbr.rel (0) target = $region9
    $region8: #{tpu_custom_call.1} parent=1 // pred_region
      %29 = vsyncadd [#allocation7], 0
      %s30 = sshll.u32 %s1, 4
      %s31 = int_to_ptr.hbm [resolvable:$true] %s30
      %s32 = sshll.u32 [#allocation6], 4
      %s33 = int_to_ptr.vmem [resolvable:$true] %s32
      %38 = dma.hbm_to_vmem [thread:$0]  %s31, 1024, %s33, [#allocation7], 64, 64, 4
    $region9: #{tpu_custom_call.1} parent=1 // pred_fallthru
      _
    // Predicated region
    $region10: #{tpu_custom_call.1} parent=1 // pred_check
      _
    $region11: #{tpu_custom_call.1} parent=1 // pred_check_branch
      %40 = sbr.rel (0) target = $region13
    $region12: #{tpu_custom_call.1} parent=1 // pred_region
      _
    $region13: #{tpu_custom_call.1} parent=1 // pred_fallthru
      _
    // Predicated region
    $region14: #{tpu_custom_call.1} parent=1 // pred_check
      _
    $region15: #{tpu_custom_call.1} parent=1 // pred_check_branch
      %42 = sbr.rel (0) target = $region17
    $region16: #{tpu_custom_call.1} parent=1 // pred_region
      %44 = vsyncadd [#allocation7], 0
      %s45 = sshll.u32 %s3, 4
      %s46 = int_to_ptr.hbm [resolvable:$true] %s45
      %s47 = sshll.u32 [#allocation8], 4
      %s48 = int_to_ptr.vmem [resolvable:$true] %s47
      %53 = dma.hbm_to_vmem [thread:$0]  %s46, 1024, %s48, [#allocation7], 64, 64, 4
    $region17: #{tpu_custom_call.1} parent=1 // pred_fallthru
      _
    // Predicated region
    $region18: #{tpu_custom_call.1} parent=1 // pred_check
      _
    $region19: #{tpu_custom_call.1} parent=1 // pred_check_branch
      %55 = sbr.rel (0) target = $region21
    $region20: #{tpu_custom_call.1} parent=1 // pred_region
      _
    $region21: #{tpu_custom_call.1} parent=1 // pred_fallthru
      _
    // Predicated region
    $region22: #{tpu_custom_call.1} parent=1 // pred_check
      _
    $region23: #{tpu_custom_call.1} parent=1 // pred_check_branch
      %57 = sbr.rel (0) target = $region25
    $region24: #{tpu_custom_call.1} parent=1 // pred_region
      %59 = dma.done [#allocation4], 1024
    $region25: #{tpu_custom_call.1} parent=1 // pred_fallthru
      _
    // Predicated region
    $region26: #{tpu_custom_call.1} parent=1 // pred_check
      _
    $region27: #{tpu_custom_call.1} parent=1 // pred_check_branch
      %61 = sbr.rel (0) target = $region29
    $region28: #{tpu_custom_call.1} parent=1 // pred_region
      %63 = dma.done [#allocation7], 1024
    $region29: #{tpu_custom_call.1} parent=1 // pred_fallthru
      _
    // Predicated region
    $region30: #{tpu_custom_call.1} parent=1 // pred_check
      _
    $region31: #{tpu_custom_call.1} parent=1 // pred_check_branch
      %65 = sbr.rel (0) target = $region33
    $region32: #{tpu_custom_call.1} parent=1 // pred_region
      %67 = dma.done [#allocation7], 1024
    $region33: #{tpu_custom_call.1} parent=1 // pred_fallthru
      _
    %p68 = scmp.eq.s32.totalorder 0, 0
    // Predicated region
    $region34: #{tpu_custom_call.1} parent=1 // pred_check
      %p69 = pneg %p68
    $region35: #{tpu_custom_call.1} parent=1 // pred_check_branch
      %71 = sbr.rel (%p69) target = $region37
    $region36: #{tpu_custom_call.1} parent=1 // pred_region
      %72 = vst [vmem:[#allocation2] sm:$0xff] 0.0
      %73 = vst [vmem:[#allocation2 + $0x8] sm:$0xff] 0.0
      %74 = vst [vmem:[#allocation2 + $0x10] sm:$0xff] 0.0
      %75 = vst [vmem:[#allocation2 + $0x18] sm:$0xff] 0.0
      %76 = vst [vmem:[#allocation2 + $0x20] sm:$0xff] 0.0
      %77 = vst [vmem:[#allocation2 + $0x28] sm:$0xff] 0.0
      %78 = vst [vmem:[#allocation2 + $0x30] sm:$0xff] 0.0
      %79 = vst [vmem:[#allocation2 + $0x38] sm:$0xff] 0.0
      %80 = vst [vmem:[#allocation2 + $0x40] sm:$0xff] 0.0
      %81 = vst [vmem:[#allocation2 + $0x48] sm:$0xff] 0.0
      %82 = vst [vmem:[#allocation2 + $0x50] sm:$0xff] 0.0
      %83 = vst [vmem:[#allocation2 + $0x58] sm:$0xff] 0.0
      %84 = vst [vmem:[#allocation2 + $0x60] sm:$0xff] 0.0
      %85 = vst [vmem:[#allocation2 + $0x68] sm:$0xff] 0.0
      %86 = vst [vmem:[#allocation2 + $0x70] sm:$0xff] 0.0
      %87 = vst [vmem:[#allocation2 + $0x78] sm:$0xff] 0.0
    $region37: #{tpu_custom_call.1} parent=1 // pred_fallthru
      _
    %s88 = smul.u32 0, 128
    %s89 = sshra.s32 %s88, 3
    %s90 = sand.u32 %s88, 7
    %s91 = smul.addr %s89, 4
    %s92 = scalar_lea.vmem [#allocation6], %s91
    %v93 = vld [vmem:[%s92] sm:$0xf]
    %v94 = vld [vmem:[%s92 + $0x4] sm:$0xf]
    %v95 = vld [vmem:[%s92 + $0x8] sm:$0xf]
    %v96 = vld [vmem:[%s92 + $0xc] sm:$0xf]
    %v97 = vld [vmem:[%s92 + $0x10] sm:$0xf]
    %v98 = vld [vmem:[%s92 + $0x14] sm:$0xf]
    %v99 = vld [vmem:[%s92 + $0x18] sm:$0xf]
    %v100 = vld [vmem:[%s92 + $0x1c] sm:$0xf]
    %v101 = vld [vmem:[%s92 + $0x20] sm:$0xf]
    %v102 = vld [vmem:[%s92 + $0x24] sm:$0xf]
    %v103 = vld [vmem:[%s92 + $0x28] sm:$0xf]
    %v104 = vld [vmem:[%s92 + $0x2c] sm:$0xf]
    %v105 = vld [vmem:[%s92 + $0x30] sm:$0xf]
    %v106 = vld [vmem:[%s92 + $0x34] sm:$0xf]
    %v107 = vld [vmem:[%s92 + $0x38] sm:$0xf]
    %v108 = vld [vmem:[%s92 + $0x3c] sm:$0xf]
    %v109 = vld [vmem:[#allocation2] sm:$0xff]
    %v110 = vld [vmem:[#allocation2 + $0x8] sm:$0xff]
    %v111 = vld [vmem:[#allocation2 + $0x10] sm:$0xff]
    %v112 = vld [vmem:[#allocation2 + $0x18] sm:$0xff]
    %v113 = vld [vmem:[#allocation2 + $0x20] sm:$0xff]
    %v114 = vld [vmem:[#allocation2 + $0x28] sm:$0xff]
    %v115 = vld [vmem:[#allocation2 + $0x30] sm:$0xff]
    %v116 = vld [vmem:[#allocation2 + $0x38] sm:$0xff]
    %v117 = vld [vmem:[#allocation2 + $0x40] sm:$0xff]
    %v118 = vld [vmem:[#allocation2 + $0x48] sm:$0xff]
    %v119 = vld [vmem:[#allocation2 + $0x50] sm:$0xff]
    %v120 = vld [vmem:[#allocation2 + $0x58] sm:$0xff]
    %v121 = vld [vmem:[#allocation2 + $0x60] sm:$0xff]
    %v122 = vld [vmem:[#allocation2 + $0x68] sm:$0xff]
    %v123 = vld [vmem:[#allocation2 + $0x70] sm:$0xff]
    %v124 = vld [vmem:[#allocation2 + $0x78] sm:$0xff]
    %v125 = vld [vmem:[#allocation3] sm:$0xf]
    %v126 = vld [vmem:[#allocation3 + $0x4] sm:$0xf]
    %v127 = vld [vmem:[#allocation3 + $0x8] sm:$0xf]
    %v128 = vld [vmem:[#allocation3 + $0xc] sm:$0xf]
    %v129 = vld [vmem:[#allocation3 + $0x10] sm:$0xf]
    %v130 = vld [vmem:[#allocation3 + $0x14] sm:$0xf]
    %v131 = vld [vmem:[#allocation3 + $0x18] sm:$0xf]
    %v132 = vld [vmem:[#allocation3 + $0x1c] sm:$0xf]
    %v133 = vld [vmem:[#allocation3 + $0x20] sm:$0xf]
    %v134 = vld [vmem:[#allocation3 + $0x24] sm:$0xf]
    %v135 = vld [vmem:[#allocation3 + $0x28] sm:$0xf]
    %v136 = vld [vmem:[#allocation3 + $0x2c] sm:$0xf]
    %v137 = vld [vmem:[#allocation3 + $0x30] sm:$0xf]
    %v138 = vld [vmem:[#allocation3 + $0x34] sm:$0xf]
    %v139 = vld [vmem:[#allocation3 + $0x38] sm:$0xf]
    %v140 = vld [vmem:[#allocation3 + $0x3c] sm:$0xf]
    %v157 = vunpack.c.l.b16 %v125
    %v158 = vunpack.c.l.b16 %v126
    %v159 = vunpack.c.l.b16 %v127
    %v160 = vunpack.c.l.b16 %v128
    %v161 = vunpack.c.l.b16 %v129
    %v162 = vunpack.c.l.b16 %v130
    %v163 = vunpack.c.l.b16 %v131
    %v164 = vunpack.c.l.b16 %v132
    %v165 = vunpack.c.l.b16 %v133
    %v166 = vunpack.c.l.b16 %v134
    %v167 = vunpack.c.l.b16 %v135
    %v168 = vunpack.c.l.b16 %v136
    %v169 = vunpack.c.l.b16 %v137
    %v170 = vunpack.c.l.b16 %v138
    %v171 = vunpack.c.l.b16 %v139
    %v172 = vunpack.c.l.b16 %v140
    %v173 = vpack.c.b16 %v158, %v157
    %v174 = vpack.c.b16 %v160, %v159
    %v175 = vpack.c.b16 %v162, %v161
    %v176 = vpack.c.b16 %v164, %v163
    %v177 = vpack.c.b16 %v166, %v165
    %v178 = vpack.c.b16 %v168, %v167
    %v179 = vpack.c.b16 %v170, %v169
    %v180 = vpack.c.b16 %v172, %v171
    %v205 = vunpack.c.l.b16 %v93
    %v206 = vunpack.c.l.b16 %v94
    %v207 = vunpack.c.l.b16 %v95
    %v208 = vunpack.c.l.b16 %v96
    %v209 = vunpack.c.l.b16 %v97
    %v210 = vunpack.c.l.b16 %v98
    %v211 = vunpack.c.l.b16 %v99
    %v212 = vunpack.c.l.b16 %v100
    %v213 = vunpack.c.l.b16 %v101
    %v214 = vunpack.c.l.b16 %v102
    %v215 = vunpack.c.l.b16 %v103
    %v216 = vunpack.c.l.b16 %v104
    %v217 = vunpack.c.l.b16 %v105
    %v218 = vunpack.c.l.b16 %v106
    %v219 = vunpack.c.l.b16 %v107
    %v220 = vunpack.c.l.b16 %v108
    %v221 = vpack.c.b16 %v206, %v205
    %v222 = vpack.c.b16 %v208, %v207
    %v223 = vpack.c.b16 %v210, %v209
    %v224 = vpack.c.b16 %v212, %v211
    %v225 = vpack.c.b16 %v214, %v213
    %v226 = vpack.c.b16 %v216, %v215
    %v227 = vpack.c.b16 %v218, %v217
    %v228 = vpack.c.b16 %v220, %v219
    %237 = vmatpush.bf16.msra.mxu0 %v228
    %238 = vmatpush.bf16.msra.mxu0 %v227
    %239 = vmatpush.bf16.msra.mxu0 %v226
    %240 = vmatpush.bf16.msra.mxu0 %v225
    %241 = vmatpush.bf16.msra.mxu0 %v224
    %242 = vmatpush.bf16.msra.mxu0 %v223
    %243 = vmatpush.bf16.msra.mxu0 %v222
    %244 = vmatpush.bf16.msra.mxu0 %v221
    %245 = vmatmul.bf16.gmra.mxu0 %v173
    %v246 = vpop.f32.mrf.mxu0
    %v247 = vadd.f32 0.0, %v246
    %v248 = vpop.f32.mrf.mxu0
    %v249 = vadd.f32 0.0, %v248
    %250 = vmatmul.bf16.gmra.mxu0 %v174
    %v251 = vpop.f32.mrf.mxu0
    %v252 = vadd.f32 0.0, %v251
    %v253 = vpop.f32.mrf.mxu0
    %v254 = vadd.f32 0.0, %v253
    %255 = vmatmul.bf16.gmra.mxu0 %v175
    %v256 = vpop.f32.mrf.mxu0
    %v257 = vadd.f32 0.0, %v256
    %v258 = vpop.f32.mrf.mxu0
    %v259 = vadd.f32 0.0, %v258
    %260 = vmatmul.bf16.gmra.mxu0 %v176
    %v261 = vpop.f32.mrf.mxu0
    %v262 = vadd.f32 0.0, %v261
    %v263 = vpop.f32.mrf.mxu0
    %v264 = vadd.f32 0.0, %v263
    %265 = vmatmul.bf16.gmra.mxu0 %v177
    %v266 = vpop.f32.mrf.mxu0
    %v267 = vadd.f32 0.0, %v266
    %v268 = vpop.f32.mrf.mxu0
    %v269 = vadd.f32 0.0, %v268
    %270 = vmatmul.bf16.gmra.mxu0 %v178
    %v271 = vpop.f32.mrf.mxu0
    %v272 = vadd.f32 0.0, %v271
    %v273 = vpop.f32.mrf.mxu0
    %v274 = vadd.f32 0.0, %v273
    %275 = vmatmul.bf16.gmra.mxu0 %v179
    %v276 = vpop.f32.mrf.mxu0
    %v277 = vadd.f32 0.0, %v276
    %v278 = vpop.f32.mrf.mxu0
    %v279 = vadd.f32 0.0, %v278
    %280 = vmatmul.bf16.gmra.mxu0 %v180
    %v281 = vpop.f32.mrf.mxu0
    %v282 = vadd.f32 0.0, %v281
    %v283 = vpop.f32.mrf.mxu0
    %v284 = vadd.f32 0.0, %v283
    %285 = vdwg.mxu0
    %v286 = vadd.f32 %v109, %v247
    %v287 = vadd.f32 %v110, %v249
    %v288 = vadd.f32 %v111, %v252
    %v289 = vadd.f32 %v112, %v254
    %v290 = vadd.f32 %v113, %v257
    %v291 = vadd.f32 %v114, %v259
    %v292 = vadd.f32 %v115, %v262
    %v293 = vadd.f32 %v116, %v264
    %v294 = vadd.f32 %v117, %v267
    %v295 = vadd.f32 %v118, %v269
    %v296 = vadd.f32 %v119, %v272
    %v297 = vadd.f32 %v120, %v274
    %v298 = vadd.f32 %v121, %v277
    %v299 = vadd.f32 %v122, %v279
    %v300 = vadd.f32 %v123, %v282
    %v301 = vadd.f32 %v124, %v284
    %302 = vst [vmem:[#allocation2] sm:$0xff] %v286
    %303 = vst [vmem:[#allocation2 + $0x8] sm:$0xff] %v287
    %304 = vst [vmem:[#allocation2 + $0x10] sm:$0xff] %v288
    %305 = vst [vmem:[#allocation2 + $0x18] sm:$0xff] %v289
    %306 = vst [vmem:[#allocation2 + $0x20] sm:$0xff] %v290
    %307 = vst [vmem:[#allocation2 + $0x28] sm:$0xff] %v291
    %308 = vst [vmem:[#allocation2 + $0x30] sm:$0xff] %v292
    %309 = vst [vmem:[#allocation2 + $0x38] sm:$0xff] %v293
    %310 = vst [vmem:[#allocation2 + $0x40] sm:$0xff] %v294
    %311 = vst [vmem:[#allocation2 + $0x48] sm:$0xff] %v295
    %312 = vst [vmem:[#allocation2 + $0x50] sm:$0xff] %v296
    %313 = vst [vmem:[#allocation2 + $0x58] sm:$0xff] %v297
    %314 = vst [vmem:[#allocation2 + $0x60] sm:$0xff] %v298
    %315 = vst [vmem:[#allocation2 + $0x68] sm:$0xff] %v299
    %316 = vst [vmem:[#allocation2 + $0x70] sm:$0xff] %v300
    %317 = vst [vmem:[#allocation2 + $0x78] sm:$0xff] %v301
    // Predicated region
    $region38: #{tpu_custom_call.1} parent=1 // pred_check
      %p318 = pneg %p68
    $region39: #{tpu_custom_call.1} parent=1 // pred_check_branch
      %320 = sbr.rel (%p318) target = $region41
    $region40: #{tpu_custom_call.1} parent=1 // pred_region
      %v321 = vld [vmem:[#allocation2] sm:$0xff]
      %v322 = vld [vmem:[#allocation2 + $0x8] sm:$0xff]
      %v323 = vld [vmem:[#allocation2 + $0x10] sm:$0xff]
      %v324 = vld [vmem:[#allocation2 + $0x18] sm:$0xff]
      %v325 = vld [vmem:[#allocation2 + $0x20] sm:$0xff]
      %v326 = vld [vmem:[#allocation2 + $0x28] sm:$0xff]
      %v327 = vld [vmem:[#allocation2 + $0x30] sm:$0xff]
      %v328 = vld [vmem:[#allocation2 + $0x38] sm:$0xff]
      %v329 = vld [vmem:[#allocation2 + $0x40] sm:$0xff]
      %v330 = vld [vmem:[#allocation2 + $0x48] sm:$0xff]
      %v331 = vld [vmem:[#allocation2 + $0x50] sm:$0xff]
      %v332 = vld [vmem:[#allocation2 + $0x58] sm:$0xff]
      %v333 = vld [vmem:[#allocation2 + $0x60] sm:$0xff]
      %v334 = vld [vmem:[#allocation2 + $0x68] sm:$0xff]
      %v335 = vld [vmem:[#allocation2 + $0x70] sm:$0xff]
      %v336 = vld [vmem:[#allocation2 + $0x78] sm:$0xff]
      %v337 = vpack.c.bf16 %v322, %v321
      %v338 = vpack.c.bf16 %v324, %v323
      %v339 = vpack.c.bf16 %v326, %v325
      %v340 = vpack.c.bf16 %v328, %v327
      %v341 = vpack.c.bf16 %v330, %v329
      %v342 = vpack.c.bf16 %v332, %v331
      %v343 = vpack.c.bf16 %v334, %v333
      %v344 = vpack.c.bf16 %v336, %v335
      %v345 = vld [vmem:[#allocation8] sm:$0xf]
      %v346 = vld [vmem:[#allocation8 + $0x4] sm:$0xf]
      %v347 = vld [vmem:[#allocation8 + $0x8] sm:$0xf]
      %v348 = vld [vmem:[#allocation8 + $0xc] sm:$0xf]
      %v349 = vld [vmem:[#allocation8 + $0x10] sm:$0xf]
      %v350 = vld [vmem:[#allocation8 + $0x14] sm:$0xf]
      %v351 = vld [vmem:[#allocation8 + $0x18] sm:$0xf]
      %v352 = vld [vmem:[#allocation8 + $0x1c] sm:$0xf]
      %v353 = vld [vmem:[#allocation8 + $0x20] sm:$0xf]
      %v354 = vld [vmem:[#allocation8 + $0x24] sm:$0xf]
      %v355 = vld [vmem:[#allocation8 + $0x28] sm:$0xf]
      %v356 = vld [vmem:[#allocation8 + $0x2c] sm:$0xf]
      %v357 = vld [vmem:[#allocation8 + $0x30] sm:$0xf]
      %v358 = vld [vmem:[#allocation8 + $0x34] sm:$0xf]
      %v359 = vld [vmem:[#allocation8 + $0x38] sm:$0xf]
      %v360 = vld [vmem:[#allocation8 + $0x3c] sm:$0xf]
      %v361 = vld [vmem:[%s2] sm:$0xff]
      %v362 = vld [vmem:[%s2 + $0x8] sm:$0xff]
      %v363 = vld [vmem:[%s2 + $0x10] sm:$0xff]
      %v364 = vld [vmem:[%s2 + $0x18] sm:$0xff]
      %v365 = vld [vmem:[%s2 + $0x20] sm:$0xff]
      %v366 = vld [vmem:[%s2 + $0x28] sm:$0xff]
      %v367 = vld [vmem:[%s2 + $0x30] sm:$0xff]
      %v368 = vld [vmem:[%s2 + $0x38] sm:$0xff]
      %v369 = vld [vmem:[%s2 + $0x40] sm:$0xff]
      %v370 = vld [vmem:[%s2 + $0x48] sm:$0xff]
      %v371 = vld [vmem:[%s2 + $0x50] sm:$0xff]
      %v372 = vld [vmem:[%s2 + $0x58] sm:$0xff]
      %v373 = vld [vmem:[%s2 + $0x60] sm:$0xff]
      %v374 = vld [vmem:[%s2 + $0x68] sm:$0xff]
      %v375 = vld [vmem:[%s2 + $0x70] sm:$0xff]
      %v376 = vld [vmem:[%s2 + $0x78] sm:$0xff]
      %v393 = vunpack.c.l.b16 %v345
      %v394 = vunpack.c.l.b16 %v346
      %v395 = vunpack.c.l.b16 %v347
      %v396 = vunpack.c.l.b16 %v348
      %v397 = vunpack.c.l.b16 %v349
      %v398 = vunpack.c.l.b16 %v350
      %v399 = vunpack.c.l.b16 %v351
      %v400 = vunpack.c.l.b16 %v352
      %v401 = vunpack.c.l.b16 %v353
      %v402 = vunpack.c.l.b16 %v354
      %v403 = vunpack.c.l.b16 %v355
      %v404 = vunpack.c.l.b16 %v356
      %v405 = vunpack.c.l.b16 %v357
      %v406 = vunpack.c.l.b16 %v358
      %v407 = vunpack.c.l.b16 %v359
      %v408 = vunpack.c.l.b16 %v360
      %v409 = vpack.c.b16 %v394, %v393
      %v410 = vpack.c.b16 %v396, %v395
      %v411 = vpack.c.b16 %v398, %v397
      %v412 = vpack.c.b16 %v400, %v399
      %v413 = vpack.c.b16 %v402, %v401
      %v414 = vpack.c.b16 %v404, %v403
      %v415 = vpack.c.b16 %v406, %v405
      %v416 = vpack.c.b16 %v408, %v407
      %425 = vmatpush.bf16.msra.mxu0 %v416
      %426 = vmatpush.bf16.msra.mxu0 %v415
      %427 = vmatpush.bf16.msra.mxu0 %v414
      %428 = vmatpush.bf16.msra.mxu0 %v413
      %429 = vmatpush.bf16.msra.mxu0 %v412
      %430 = vmatpush.bf16.msra.mxu0 %v411
      %431 = vmatpush.bf16.msra.mxu0 %v410
      %432 = vmatpush.bf16.msra.mxu0 %v409
      %433 = vmatmul.bf16.gmra.mxu0 %v337
      %v434 = vpop.f32.mrf.mxu0
      %v435 = vadd.f32 %v361, %v434
      %v436 = vpop.f32.mrf.mxu0
      %v437 = vadd.f32 %v362, %v436
      %438 = vmatmul.bf16.gmra.mxu0 %v338
      %v439 = vpop.f32.mrf.mxu0
      %v440 = vadd.f32 %v363, %v439
      %v441 = vpop.f32.mrf.mxu0
      %v442 = vadd.f32 %v364, %v441
      %443 = vmatmul.bf16.gmra.mxu0 %v339
      %v444 = vpop.f32.mrf.mxu0
      %v445 = vadd.f32 %v365, %v444
      %v446 = vpop.f32.mrf.mxu0
      %v447 = vadd.f32 %v366, %v446
      %448 = vmatmul.bf16.gmra.mxu0 %v340
      %v449 = vpop.f32.mrf.mxu0
      %v450 = vadd.f32 %v367, %v449
      %v451 = vpop.f32.mrf.mxu0
      %v452 = vadd.f32 %v368, %v451
      %453 = vmatmul.bf16.gmra.mxu0 %v341
      %v454 = vpop.f32.mrf.mxu0
      %v455 = vadd.f32 %v369, %v454
      %v456 = vpop.f32.mrf.mxu0
      %v457 = vadd.f32 %v370, %v456
      %458 = vmatmul.bf16.gmra.mxu0 %v342
      %v459 = vpop.f32.mrf.mxu0
      %v460 = vadd.f32 %v371, %v459
      %v461 = vpop.f32.mrf.mxu0
      %v462 = vadd.f32 %v372, %v461
      %463 = vmatmul.bf16.gmra.mxu0 %v343
      %v464 = vpop.f32.mrf.mxu0
      %v465 = vadd.f32 %v373, %v464
      %v466 = vpop.f32.mrf.mxu0
      %v467 = vadd.f32 %v374, %v466
      %468 = vmatmul.bf16.gmra.mxu0 %v344
      %v469 = vpop.f32.mrf.mxu0
      %v470 = vadd.f32 %v375, %v469
      %v471 = vpop.f32.mrf.mxu0
      %v472 = vadd.f32 %v376, %v471
      %473 = vdwg.mxu0
      %474 = vst [vmem:[#allocation9] sm:$0xff] %v435
      %475 = vst [vmem:[#allocation9 + $0x8] sm:$0xff] %v437
      %476 = vst [vmem:[#allocation9 + $0x10] sm:$0xff] %v440
      %477 = vst [vmem:[#allocation9 + $0x18] sm:$0xff] %v442
      %478 = vst [vmem:[#allocation9 + $0x20] sm:$0xff] %v445
      %479 = vst [vmem:[#allocation9 + $0x28] sm:$0xff] %v447
      %480 = vst [vmem:[#allocation9 + $0x30] sm:$0xff] %v450
      %481 = vst [vmem:[#allocation9 + $0x38] sm:$0xff] %v452
      %482 = vst [vmem:[#allocation9 + $0x40] sm:$0xff] %v455
      %483 = vst [vmem:[#allocation9 + $0x48] sm:$0xff] %v457
      %484 = vst [vmem:[#allocation9 + $0x50] sm:$0xff] %v460
      %485 = vst [vmem:[#allocation9 + $0x58] sm:$0xff] %v462
      %486 = vst [vmem:[#allocation9 + $0x60] sm:$0xff] %v465
      %487 = vst [vmem:[#allocation9 + $0x68] sm:$0xff] %v467
      %488 = vst [vmem:[#allocation9 + $0x70] sm:$0xff] %v470
      %489 = vst [vmem:[#allocation9 + $0x78] sm:$0xff] %v472
    $region41: #{tpu_custom_call.1} parent=1 // pred_fallthru
      _
    // Predicated region
    $region42: #{tpu_custom_call.1} parent=1 // pred_check
      _
    $region43: #{tpu_custom_call.1} parent=1 // pred_check_branch
      %491 = sbr.rel (0) target = $region45
    $region44: #{tpu_custom_call.1} parent=1 // pred_region
      %493 = vsyncadd [#allocation5], 0
      %s494 = sshll.u32 [#allocation9], 4
      %s495 = int_to_ptr.vmem [resolvable:$true] %s494
      %s496 = sshll.u32 %s5, 4
      %s497 = int_to_ptr.hbm [resolvable:$true] %s496
      %502 = dma.vmem_to_hbm [thread:$0]  %s495, 2048, %s497, [#allocation5], 128, 128, 8
    $region45: #{tpu_custom_call.1} parent=1 // pred_fallthru
      _
    // Predicated region
    $region46: #{tpu_custom_call.1} parent=1 // pred_check
      _
    $region47: #{tpu_custom_call.1} parent=1 // pred_check_branch
      %504 = sbr.rel (0) target = $region49
    $region48: #{tpu_custom_call.1} parent=1 // pred_region
      %506 = dma.done [#allocation5], 2048
    $region49: #{tpu_custom_call.1} parent=1 // pred_fallthru
      _
    %507 = vsyncpa [#allocation4], 1
    %508 = vsyncpa [#allocation7], 1
    %509 = vsyncpa [#allocation5], 1

</llo_original>
